<compile_context>
chip_gen: v7x
topology: tpu7x:2x2x1
jax: 0.10.0
libtpu: 0.0.40
codegen_flags: <defaults>
</compile_context>

<pallas_src>
import jax
import jax.numpy as jnp
from jax.experimental import pallas as pl
from jax.experimental.pallas import tpu as pltpu


def _pos_embed_kernel(col_ref, row_ref, o_ref):
    # col_ref: (W, C)        full col-embedding table (resident every step)
    # row_ref: (TH, C)       row-embedding rows for this block of h values
    # o_ref:   (TH, W, 2C)   output tile covering h in [i*TH, (i+1)*TH)
    th, w, two_c = o_ref.shape
    c = two_c // 2
    # Column half: identical (W, C) table replicated over the TH local rows.
    o_ref[:, :, :c] = jnp.broadcast_to(
        col_ref[...][None, :, :], (th, w, c)
    ).astype(o_ref.dtype)
    # Row half: each local row's embedding replicated over the W columns.
    o_ref[:, :, c:] = jnp.broadcast_to(
        row_ref[...][:, None, :], (th, w, c)
    ).astype(o_ref.dtype)


def position_embedding_learned(tensor, row_weight, col_weight,
                               *, max_block_bytes=4 * 1024 * 1024):
    """Pallas forward of PositionEmbeddingLearned.

    tensor:      ignored (device/shape carrier only, as in the PyTorch module)
    row_weight:  (H, C) learned row embedding table
    col_weight:  (W, C) learned col embedding table
    returns:     (H*W, 2*C) in the weights' dtype
    """
    del tensor  # values unused by the PyTorch forward
    H, C = row_weight.shape
    W, C2 = col_weight.shape
    assert C == C2, "row/col embedding widths must match"

    out_dtype = jnp.result_type(row_weight.dtype, col_weight.dtype)
    itemsize = jnp.dtype(out_dtype).itemsize

    # Fuse as many h rows per block as fits the VMEM budget (double-buffered
    # output block + tiny input tables stay well under the scoped limit).
    bytes_per_h = W * 2 * C * itemsize
    th_budget = max(1, max_block_bytes // bytes_per_h)
    if th_budget >= H:
        TH = H                      # demo & small shapes: one grid step
    else:
        TH = min(H, max(8, (th_budget // 8) * 8))  # keep sublane-aligned blocks
    grid = (pl.cdiv(H, TH),)

    pos3d = pl.pallas_call(
        _pos_embed_kernel,
        out_shape=jax.ShapeDtypeStruct((H, W, 2 * C), out_dtype),
        grid=grid,
        in_specs=[
            # full col table resident every step
            pl.BlockSpec((W, C), lambda i: (0, 0)),
            # TH row-embedding rows matching the fused output tile
            pl.BlockSpec((TH, C), lambda i: (i, 0)),
        ],
        out_specs=pl.BlockSpec((TH, W, 2 * C), lambda i: (i, 0, 0)),
        compiler_params=pltpu.CompilerParams(
            dimension_semantics=("parallel",),
            vmem_limit_bytes=32 * 1024 * 1024,
        ),
    )(col_weight, row_weight)

    # Free row-major metadata reshape == torch flatten(0, 1).
    return pos3d.reshape(H * W, 2 * C)


def _reference(row_weight, col_weight):
    H, C = row_weight.shape
    W, _ = col_weight.shape
    x = jnp.broadcast_to(col_weight[None, :, :], (H, W, C))
    y = jnp.broadcast_to(row_weight[:, None, :], (H, W, C))
    return jnp.concatenate([x, y], axis=-1).reshape(H * W, 2 * C)


if __name__ == "__main__":
    # Module config: feature_size = (H, W), num_pos_feats = C (module default 128)
    H, W, C = 8, 16, 128

    key = jax.random.PRNGKey(0)
    k_row, k_col, k_x = jax.random.split(key, 3)

    # nn.init.uniform_ -> U[0, 1)
    row_weight = jax.random.uniform(k_row, (H, C), dtype=jnp.float32)
    col_weight = jax.random.uniform(k_col, (W, C), dtype=jnp.float32)

    # NCHW dummy input (only a device/shape carrier, ignored by the forward)
    x = jax.random.normal(k_x, (2, 4, H, W), dtype=jnp.float32)

    pos = jax.block_until_ready(position_embedding_learned(x, row_weight, col_weight))

    ref = _reference(row_weight, col_weight)
    assert pos.shape == (H * W, 2 * C)
    assert pos.dtype == ref.dtype
    assert jnp.allclose(pos, ref), "mismatch vs reference"

    print("KERNEL_OK")
</pallas_src>

<mosaic_0001>
module attributes {stable_mosaic.version = 11 : i64} {
  func.func @_pos_embed_kernel(%arg0: i32, %arg1: memref<16x128xf32, #tpu.memory_space<vmem>>, %arg2: memref<8x128xf32, #tpu.memory_space<vmem>>, %arg3: memref<8x16x256xf32, #tpu.memory_space<vmem>>) attributes {dimension_semantics = [#tpu.dimension_semantics<parallel>], iteration_bounds = array<i64: 1>, scalar_prefetch = 0 : i64, scratch_operands = 0 : i64, tpu.core_type = #tpu.core_type<tc>, window_params = [{pipeline_mode = #tpu.pipeline_mode<synchronous>, transform_indices = @transform_0, window_bounds = array<i64: 16, 128>}, {transform_indices = @transform_1, window_bounds = array<i64: 8, 128>}, {transform_indices = @transform_2, window_bounds = array<i64: 8, 16, 256>}]} {
    %c0 = arith.constant 0 : index
    %c0_0 = arith.constant 0 : index
    %0 = vector.load %arg1[%c0, %c0_0] : memref<16x128xf32, #tpu.memory_space<vmem>>, vector<16x128xf32>
    %1 = vector.shape_cast %0 : vector<16x128xf32> to vector<1x16x128xf32>
    %2 = vector.shape_cast %1 : vector<1x16x128xf32> to vector<1x16x128xf32>
    %3 = vector.broadcast %2 : vector<1x16x128xf32> to vector<8x16x128xf32>
    %c0_1 = arith.constant 0 : index
    %c0_2 = arith.constant 0 : index
    %c0_3 = arith.constant 0 : index
    %4 = vector.load %arg3[%c0_1, %c0_2, %c0_3] : memref<8x16x256xf32, #tpu.memory_space<vmem>>, vector<8x16x128xf32>
    tpu.vector_store %arg3[%c0_1, %c0_2, %c0_3], %3 {strides = array<i32>} : memref<8x16x256xf32, #tpu.memory_space<vmem>>, vector<8x16x128xf32>,
    %c0_4 = arith.constant 0 : index
    %c0_5 = arith.constant 0 : index
    %5 = vector.load %arg2[%c0_4, %c0_5] : memref<8x128xf32, #tpu.memory_space<vmem>>, vector<8x128xf32>
    %6 = vector.shape_cast %5 : vector<8x128xf32> to vector<8x1x128xf32>
    %7 = vector.shape_cast %6 : vector<8x1x128xf32> to vector<8x1x128xf32>
    %8 = vector.broadcast %7 : vector<8x1x128xf32> to vector<8x16x128xf32>
    %c0_6 = arith.constant 0 : index
    %c0_7 = arith.constant 0 : index
    %c128 = arith.constant 128 : index
    %9 = vector.load %arg3[%c0_6, %c0_7, %c128] : memref<8x16x256xf32, #tpu.memory_space<vmem>>, vector<8x16x128xf32>
    tpu.vector_store %arg3[%c0_6, %c0_7, %c128], %8 {strides = array<i32>} : memref<8x16x256xf32, #tpu.memory_space<vmem>>, vector<8x16x128xf32>,
    return
  }
  func.func @transform_0(%arg0: i32) -> (i32, i32) {
    %c0_i32 = arith.constant 0 : i32
    %c0_i32_0 = arith.constant 0 : i32
    %c0_i32_1 = arith.constant 0 : i32
    return %c0_i32, %c0_i32_0 : i32, i32
  }
  func.func @transform_1(%arg0: i32) -> (i32, i32) {
    %c0_i32 = arith.constant 0 : i32
    %c0_i32_0 = arith.constant 0 : i32
    return %arg0, %c0_i32 : i32, i32
  }
  func.func @transform_2(%arg0: i32) -> (i32, i32, i32) {
    %c0_i32 = arith.constant 0 : i32
    %c0_i32_0 = arith.constant 0 : i32
    %c0_i32_1 = arith.constant 0 : i32
    return %arg0, %c0_i32, %c0_i32_0 : i32, i32, i32
  }
}

</mosaic_0001>

<llo_original>
// kernel: tpu_custom_call.1
$region0: #{tpu_custom_call.1}
  #allocation0 [shape = 'u32[]', space=smem, size = 0x4, offset = 0x4, fixed_abs, tag = 'smem constant byte address 0x4 - core index']
  #allocation1 [shape = 'u32[144,128]{1,0:T(1,128)}', space=vmem, size = 0x12000, scoped, tag = 'internal scratch']
  %s0 = inlined_call_operand.hbm [shape: f32[16,128], index: 0, kind: input, shape index: {}]
  %s1 = inlined_call_operand.hbm [shape: f32[8,128], index: 1, kind: input, shape index: {}]
  %s2 = inlined_call_operand.hbm [shape: f32[8,16,256], index: 2, kind: output, shape index: {}]
  %s3 = sld [smem:[#allocation0]]
  $region26: #{tpu_custom_call.1} parent=0
    _
  %s5 = ssub.s32 1, %s3
  %s6 = scalar_select 0, %s5, %s3
  $region1: #{tpu_custom_call.1} parent=0
    #allocation2 [shape = 'u8[8192]{0}', space=vmem, size = 0x2000, scoped, tag = 'input window, operand 0, single buffered']
    #allocation3 [shape = 's32[1]{0}', space=sflag, size = 0x4, scoped, tag = 'scoped memory for tpu_custom_call.1']
    #allocation4 [shape = 's32[1]{0}', space=sflag, size = 0x4, scoped, tag = 'scoped memory for tpu_custom_call.1']
    #allocation5 [shape = 'u8[4096]{0}', space=vmem, size = 0x1000, scoped, tag = 'input window, operand 1, single buffered']
    #allocation6 [shape = 's32[1]{0}', space=sflag, size = 0x4, scoped, tag = 'scoped memory for tpu_custom_call.1']
    #allocation7 [shape = 'u8[131072]{0}', space=vmem, size = 0x20000, scoped, tag = 'output window, operand 0, single buffered']
    %7 = vsyncpa [#allocation3], 0
    %8 = vsyncpa [#allocation6], 0
    %9 = vsyncpa [#allocation4], 0
    // Predicated region
    $region2: #{tpu_custom_call.1} parent=1 // pred_check
      _
    $region3: #{tpu_custom_call.1} parent=1 // pred_check_branch
      %11 = sbr.rel (0) target = $region5
    $region4: #{tpu_custom_call.1} parent=1 // pred_region
      %s13 = ssub.s32 256, 256
      %14 = vsyncadd [#allocation3], %s13
      %s15 = sshll.u32 [#allocation2], 4
      %s16 = int_to_ptr.vmem [resolvable:$true] %s15
      %21 = dma.hbm_to_vmem [thread:$0]  %s0, 256, %s16, [#allocation3], 128, 128, 8
    $region5: #{tpu_custom_call.1} parent=1 // pred_fallthru
      _
    // Predicated region
    $region6: #{tpu_custom_call.1} parent=1 // pred_check
      _
    $region7: #{tpu_custom_call.1} parent=1 // pred_check_branch
      %23 = sbr.rel (0) target = $region9
    $region8: #{tpu_custom_call.1} parent=1 // pred_region
      %s25 = ssub.s32 128, 128
      %26 = vsyncadd [#allocation6], %s25
      %s28 = sshll.u32 [#allocation5], 4
      %s29 = int_to_ptr.vmem [resolvable:$true] %s28
      %31 = dma.hbm_to_vmem [thread:$0]  %s1, 128, %s29, [#allocation6]
    $region9: #{tpu_custom_call.1} parent=1 // pred_fallthru
      _
    // Predicated region
    $region10: #{tpu_custom_call.1} parent=1 // pred_check
      _
    $region11: #{tpu_custom_call.1} parent=1 // pred_check_branch
      %33 = sbr.rel (0) target = $region13
    $region12: #{tpu_custom_call.1} parent=1 // pred_region
      %34 = dma.done [#allocation3], 256
    $region13: #{tpu_custom_call.1} parent=1 // pred_fallthru
      _
    // Predicated region
    $region14: #{tpu_custom_call.1} parent=1 // pred_check
      _
    $region15: #{tpu_custom_call.1} parent=1 // pred_check_branch
      %36 = sbr.rel (0) target = $region17
    $region16: #{tpu_custom_call.1} parent=1 // pred_region
      %37 = dma.done [#allocation6], 128
    $region17: #{tpu_custom_call.1} parent=1 // pred_fallthru
      _
    %v38 = vld [vmem:[#allocation2] sm:$0xff]
    %v39 = vld [vmem:[#allocation2 + $0x8] sm:$0xff]
    %40 = vst [vmem:[#allocation7] sm:$0xff] %v38
    %41 = vst [vmem:[#allocation7 + $0x10] sm:$0xff] %v39
    %42 = vst [vmem:[#allocation7 + $0x20] sm:$0xff] %v38
    %43 = vst [vmem:[#allocation7 + $0x30] sm:$0xff] %v39
    %44 = vst [vmem:[#allocation7 + $0x40] sm:$0xff] %v38
    %45 = vst [vmem:[#allocation7 + $0x50] sm:$0xff] %v39
    %46 = vst [vmem:[#allocation7 + $0x60] sm:$0xff] %v38
    %47 = vst [vmem:[#allocation7 + $0x70] sm:$0xff] %v39
    %48 = vst [vmem:[#allocation7 + $0x80] sm:$0xff] %v38
    %49 = vst [vmem:[#allocation7 + $0x90] sm:$0xff] %v39
    %50 = vst [vmem:[#allocation7 + $0xa0] sm:$0xff] %v38
    %51 = vst [vmem:[#allocation7 + $0xb0] sm:$0xff] %v39
    %52 = vst [vmem:[#allocation7 + $0xc0] sm:$0xff] %v38
    %53 = vst [vmem:[#allocation7 + $0xd0] sm:$0xff] %v39
    %54 = vst [vmem:[#allocation7 + $0xe0] sm:$0xff] %v38
    %55 = vst [vmem:[#allocation7 + $0xf0] sm:$0xff] %v39
    %v56 = vld [vmem:[#allocation5] sm:$0xff]
    %v58 = vcombine.high %v56, %v56
    %v60 = vunpack.c.l.s4 1966171168
    %v61 = vunpack.c.0.s8 %v60
    %v62 = vlaneseq
    %v63 = vshrl.u32 %v62, 7
    %v64 = vsub.s32 %v61, %v63
    %v65 = vrot.slane %v56, %v64
    %v67 = vunpack.c.l.s4 1966171168
    %v68 = vunpack.c.0.s8 %v67
    %v69 = vlaneseq
    %v70 = vshrl.u32 %v69, 7
    %v71 = vsub.s32 %v68, %v70
    %v72 = vrot.slane %v58, %v71
    %v73 = vcombine.high %v65, %v65
    %v74 = vcombine.high %v72, %v72
    %v76 = vunpack.c.l.s4 1966171168
    %v77 = vunpack.c.0.s8 %v76
    %v78 = vlaneseq
    %v79 = vshrl.u32 %v78, 7
    %v80 = vsub.s32 %v77, %v79
    %v81 = vrot.slane %v65, %v80
    %v83 = vunpack.c.l.s4 1966171168
    %v84 = vunpack.c.0.s8 %v83
    %v85 = vlaneseq
    %v86 = vshrl.u32 %v85, 7
    %v87 = vsub.s32 %v84, %v86
    %v88 = vrot.slane %v72, %v87
    %v90 = vunpack.c.l.s4 1966171168
    %v91 = vunpack.c.0.s8 %v90
    %v92 = vlaneseq
    %v93 = vshrl.u32 %v92, 7
    %v94 = vsub.s32 %v91, %v93
    %v95 = vrot.slane %v73, %v94
    %v97 = vunpack.c.l.s4 1966171168
    %v98 = vunpack.c.0.s8 %v97
    %v99 = vlaneseq
    %v100 = vshrl.u32 %v99, 7
    %v101 = vsub.s32 %v98, %v100
    %v102 = vrot.slane %v74, %v101
    %v103 = vcombine.high %v81, %v81
    %v104 = vcombine.high %v88, %v88
    %v105 = vcombine.high %v95, %v95
    %v106 = vcombine.high %v102, %v102
    %v107 = vlaneseq
    %v108 = vshrl.u32 %v107, 7
    %v109 = vsub.s32 0, %v108
    %v110 = vrot.slane %v81, %v109
    %v111 = vlaneseq
    %v112 = vshrl.u32 %v111, 7
    %v113 = vsub.s32 0, %v112
    %v114 = vrot.slane %v95, %v113
    %v115 = vlaneseq
    %v116 = vshrl.u32 %v115, 7
    %v117 = vsub.s32 0, %v116
    %v118 = vrot.slane %v103, %v117
    %v119 = vlaneseq
    %v120 = vshrl.u32 %v119, 7
    %v121 = vsub.s32 0, %v120
    %v122 = vrot.slane %v105, %v121
    %v123 = vlaneseq
    %v124 = vshrl.u32 %v123, 7
    %v125 = vsub.s32 0, %v124
    %v126 = vrot.slane %v88, %v125
    %v127 = vlaneseq
    %v128 = vshrl.u32 %v127, 7
    %v129 = vsub.s32 0, %v128
    %v130 = vrot.slane %v102, %v129
    %v131 = vlaneseq
    %v132 = vshrl.u32 %v131, 7
    %v133 = vsub.s32 0, %v132
    %v134 = vrot.slane %v104, %v133
    %v135 = vlaneseq
    %v136 = vshrl.u32 %v135, 7
    %v137 = vsub.s32 0, %v136
    %v138 = vrot.slane %v106, %v137
    %147 = vst [vmem:[#allocation7 + $0x8] sm:$0xff] %v110
    %148 = vst [vmem:[#allocation7 + $0x18] sm:$0xff] %v110
    %149 = vst [vmem:[#allocation7 + $0x28] sm:$0xff] %v114
    %150 = vst [vmem:[#allocation7 + $0x38] sm:$0xff] %v114
    %151 = vst [vmem:[#allocation7 + $0x48] sm:$0xff] %v118
    %152 = vst [vmem:[#allocation7 + $0x58] sm:$0xff] %v118
    %153 = vst [vmem:[#allocation7 + $0x68] sm:$0xff] %v122
    %154 = vst [vmem:[#allocation7 + $0x78] sm:$0xff] %v122
    %155 = vst [vmem:[#allocation7 + $0x88] sm:$0xff] %v126
    %156 = vst [vmem:[#allocation7 + $0x98] sm:$0xff] %v126
    %157 = vst [vmem:[#allocation7 + $0xa8] sm:$0xff] %v130
    %158 = vst [vmem:[#allocation7 + $0xb8] sm:$0xff] %v130
    %159 = vst [vmem:[#allocation7 + $0xc8] sm:$0xff] %v134
    %160 = vst [vmem:[#allocation7 + $0xd8] sm:$0xff] %v134
    %161 = vst [vmem:[#allocation7 + $0xe8] sm:$0xff] %v138
    %162 = vst [vmem:[#allocation7 + $0xf8] sm:$0xff] %v138
    // Predicated region
    $region18: #{tpu_custom_call.1} parent=1 // pred_check
      _
    $region19: #{tpu_custom_call.1} parent=1 // pred_check_branch
      %164 = sbr.rel (0) target = $region21
    $region20: #{tpu_custom_call.1} parent=1 // pred_region
      %s166 = ssub.s32 4096, 4096
      %167 = vsyncadd [#allocation4], %s166
      %s168 = sshll.u32 [#allocation7], 4
      %s169 = int_to_ptr.vmem [resolvable:$true] %s168
      %174 = dma.vmem_to_hbm [thread:$0]  %s169, 4096, %s2, [#allocation4], 256, 256, 16
    $region21: #{tpu_custom_call.1} parent=1 // pred_fallthru
      _
    // Predicated region
    $region22: #{tpu_custom_call.1} parent=1 // pred_check
      _
    $region23: #{tpu_custom_call.1} parent=1 // pred_check_branch
      %176 = sbr.rel (0) target = $region25
    $region24: #{tpu_custom_call.1} parent=1 // pred_region
      %177 = dma.done [#allocation4], 4096
    $region25: #{tpu_custom_call.1} parent=1 // pred_fallthru
      _
    %178 = vsyncpa [#allocation3], 1
    %179 = vsyncpa [#allocation6], 1
    %180 = vsyncpa [#allocation4], 1

</llo_original>
